<compile_context>
chip_gen: v6e
topology: v6e:2x2x1
jax: 0.10.0
libtpu: 0.0.40
codegen_flags: <defaults>
</compile_context>

<pallas_src>
import functools

import jax
import jax.numpy as jnp
from jax.experimental import pallas as pl
from jax.experimental.pallas import tpu as pltpu


def _node_agg_kernel(x_ref, adj_ref, mask_ref, w1t_ref, b1_ref, w2t_ref, b2_ref,
                     pfeat_ref, padj_ref):
    bt, n, f = x_ref.shape
    m = bt * n

    # bf16 ingest: x/adj blocks arrive in bf16 already (no in-kernel recast of adj).
    x_bf = x_ref[...]                                   # [Bt, N, F] bf16
    x2d = x_bf.reshape(m, f)                            # collapse leading dims (free)

    # ---- assignment MLP in the transposed layout: logits^T is [K, Bt*N] ----
    # K rides the sublane axis, so the softmax VPU/EUP work below is vreg-dense.
    h_t = jax.lax.dot_general(
        w1t_ref[...], x2d,                              # [K,F] . [M,F]^T -> [K,M]
        dimension_numbers=(((1,), (1,)), ((), ())),
        preferred_element_type=jnp.float32) + b1_ref[...]
    h_t = jnp.maximum(h_t, 0.0)
    logits_t = jax.lax.dot_general(
        w2t_ref[...], h_t.astype(jnp.bfloat16),         # [K,K] @ [K,M] -> [K,M]
        dimension_numbers=(((1,), (0,)), ((), ())),
        preferred_element_type=jnp.float32) + b2_ref[...]

    # Masked nodes: every logit == -1e9 -> uniform 1/K after softmax, matching the
    # module's fp32 -1e9*(1-mask) saturation, via a single vreg select.
    mask_row = mask_ref[0]                              # [1, Bt*N] f32
    logits_t = jnp.where(mask_row > 0.0, logits_t, -1.0e9)

    # Softmax over K (the sublane axis); reciprocal goes to the EUP.
    lmax = jnp.max(logits_t, axis=0, keepdims=True)
    e = jnp.exp(logits_t - lmax)
    s_t = e * pl.reciprocal(jnp.sum(e, axis=0, keepdims=True), approx=True)
    s_bf = s_t.astype(jnp.bfloat16)                     # S^T, [K, Bt*N]

    # ---- per-sample pooling: plain 2-D MXU matmuls on static lane slices ----
    for b in range(bt):
        s_b = s_bf[:, b * n:(b + 1) * n]                # [K, N]  (= S_b^T)
        x_b = x_bf[b]                                   # [N, F] bf16
        adj_b = adj_ref[b]                              # [N, N] bf16

        # pfeat = S^T x
        pfeat_b = jnp.dot(s_b, x_b, preferred_element_type=jnp.float32)   # [K, F]
        # pooled = (S^T A) S : lane-dense [K, N] intermediate
        sta_b = jnp.dot(s_b, adj_b, preferred_element_type=jnp.float32)   # [K, N]
        pooled_b = jax.lax.dot_general(
            sta_b.astype(jnp.bfloat16), s_b,
            dimension_numbers=(((1,), (1,)), ((), ())),
            preferred_element_type=jnp.float32)                           # [K, K]

        # (threshold_topk_sparsify is a forward no-op: its STE value == pooled.)
        # Symmetric degree normalization D^{-1/2} A D^{-1/2} (rsqrt on the EUP).
        row_sum = jnp.sum(pooled_b, axis=-1, keepdims=True)               # [K, 1]
        d_inv_sqrt = jax.lax.rsqrt(row_sum + 1e-9)
        pooled_b = pooled_b * d_inv_sqrt                                   # rows
        pooled_b = pooled_b * jnp.swapaxes(d_inv_sqrt, 0, 1)               # cols

        pfeat_ref[b] = pfeat_b.astype(pfeat_ref.dtype)
        padj_ref[b] = pooled_b.astype(padj_ref.dtype)


def _vmem_capacity_bytes():
    """Generation-aware VMEM capacity (conservative 64 MiB fallback = v7x)."""
    try:
        info = pltpu.get_tpu_info()
        cap = getattr(info, "vmem_capacity_bytes", None)
        if cap:
            return int(cap)
    except Exception:
        pass
    return 64 * 2 ** 20


def _vmem_bytes_estimate(bb, n, f, k):
    """Per-call VMEM need: double-buffered blocks + in-kernel temporaries."""
    in_blocks = bb * n * n * 2 + bb * n * f * 2 + bb * n * 4      # adj/x bf16, mask f32
    out_blocks = bb * k * f * 4 + bb * k * k * 4
    weights = (k * f + k * k) * 2 + 2 * k * 4
    pipelined = 2 * (in_blocks + out_blocks + weights)            # double buffering
    tmps = (bb * n * f * 2                                        # x2d bf16 copy
            + (3 * 4 + 2) * k * bb * n                            # h/logits/S f32 + S bf16
            + 2 * n * n * 2 + n * f * 2                           # per-sample adj/x values
            + 8 * k * max(n, f) * 4)                              # small per-sample temps
    return pipelined + tmps + (2 << 20)                           # slack


def _pick_block_b(batch, n, f, k, budget_bytes, max_bb=16):
    divisors = [d for d in range(1, batch + 1) if batch % d == 0]
    fitting = [d for d in divisors
               if d <= max_bb and _vmem_bytes_estimate(d, n, f, k) <= budget_bytes]
    if not fitting:
        fitting = [1]   # TODO(synk): N-chunk reduction axis for very large N
    # Prefer grid length >= 2 (and even) so v7x can shard batch chunks across
    # both TensorCores without a tail imbalance.
    even = [d for d in fitting if (batch // d) >= 2 and (batch // d) % 2 == 0]
    ge2 = [d for d in fitting if (batch // d) >= 2]
    return max(even or ge2 or fitting)


@functools.partial(jax.jit, static_argnames=("out_nodes", "block_b"))
def node_aggregator_forward(x, adj, mask, w1, b1, w2, b2, *, out_nodes,
                            block_b=None):
    B, N, F = x.shape
    K = out_nodes

    cap = _vmem_capacity_bytes()
    budget = (cap * 3) // 4            # ~48 MiB on v7x, ~96 MiB on v5e/v6e
    if block_b is None:
        block_b = _pick_block_b(B, N, F, K, budget)
    assert B % block_b == 0, "block_b must divide B (avoids a padding HBM round-trip)"
    num_steps = B // block_b

    # bf16 ingest of the two big tensors (callers can pass bf16 to skip the cast).
    x_bf = x if x.dtype == jnp.bfloat16 else x.astype(jnp.bfloat16)
    adj_bf = adj if adj.dtype == jnp.bfloat16 else adj.astype(jnp.bfloat16)
    # Lane-dense mask layout: one contiguous [1, block_b*N] row per grid step.
    mask_rows = mask.astype(jnp.float32).reshape(num_steps, 1, block_b * N)

    w1t = jnp.asarray(w1, jnp.float32).T.astype(jnp.bfloat16)      # [K, F]
    w2t = jnp.asarray(w2, jnp.float32).T.astype(jnp.bfloat16)      # [K, K]
    b1c = jnp.asarray(b1, jnp.float32).reshape(K, 1)
    b2c = jnp.asarray(b2, jnp.float32).reshape(K, 1)

    out_shapes = (
        jax.ShapeDtypeStruct((B, K, F), jnp.float32),   # pfeat_main
        jax.ShapeDtypeStruct((B, K, K), jnp.float32),   # pooled_adj
    )

    grid_spec = pltpu.PrefetchScalarGridSpec(
        num_scalar_prefetch=0,
        grid=(num_steps,),
        in_specs=[
            pl.BlockSpec((block_b, N, F), lambda s: (s, 0, 0)),      # x (bf16)
            pl.BlockSpec((block_b, N, N), lambda s: (s, 0, 0)),      # adj (bf16)
            pl.BlockSpec((1, 1, block_b * N), lambda s: (s, 0, 0)),  # mask row (f32)
            pl.BlockSpec((K, F), lambda s: (0, 0)),                  # W1^T
            pl.BlockSpec((K, 1), lambda s: (0, 0)),                  # b1
            pl.BlockSpec((K, K), lambda s: (0, 0)),                  # W2^T
            pl.BlockSpec((K, 1), lambda s: (0, 0)),                  # b2
        ],
        out_specs=[
            pl.BlockSpec((block_b, K, F), lambda s: (s, 0, 0)),      # pfeat_main
            pl.BlockSpec((block_b, K, K), lambda s: (s, 0, 0)),      # pooled_adj
        ],
    )

    pfeat, padj = pl.pallas_call(
        _node_agg_kernel,
        out_shape=out_shapes,
        grid_spec=grid_spec,
        compiler_params=pltpu.CompilerParams(
            dimension_semantics=("parallel",),
            vmem_limit_bytes=int(budget)),
    )(x_bf, adj_bf, mask_rows, w1t, b1c, w2t, b2c)

    # pmask is a compile-time constant -> emit it in the wrapper (no kernel DMA).
    pmask = jnp.ones((B, K), jnp.float32)
    return pfeat, padj, pmask


def _reference_forward(x, adj, mask, w1, b1, w2, b2, out_nodes):
    """Pure-JAX f32 reference mirroring the PyTorch forward."""
    B, N, F = x.shape
    K = out_nodes
    x2d = x.reshape(B * N, F)
    h = jnp.maximum(x2d @ w1 + b1, 0.0)
    logits = h @ w2 + b2
    logits = logits + (-1.0e9) * (1.0 - mask.reshape(B * N, 1))
    s = jax.nn.softmax(logits, axis=1).reshape(B, N, K)
    pfeat = jnp.einsum("bnk,bnf->bkf", s, x)
    mid = jnp.einsum("bnm,bmk->bnk", adj, s)
    pooled = jnp.einsum("bnk,bnj->bkj", s, mid)
    row_sum = pooled.sum(-1)
    d = 1.0 / jnp.sqrt(row_sum + 1e-9)
    pooled = pooled * d[:, :, None] * d[:, None, :]
    return pfeat, pooled, jnp.ones((B, K), jnp.float32)


if __name__ == "__main__":
    # Small shapes consistent with the module's forward.
    B, N, F, K = 2, 16, 32, 8   # batch, in_nodes, in_features, out_nodes

    key = jax.random.PRNGKey(0)
    kx, ka, km, kw1, kb1, kw2, kb2 = jax.random.split(key, 7)

    x = jax.random.normal(kx, (B, N, F), dtype=jnp.float32)
    adj_raw = jax.random.uniform(ka, (B, N, N), dtype=jnp.float32)
    adj = 0.5 * (adj_raw + jnp.swapaxes(adj_raw, 1, 2))   # symmetric adjacency
    mask = (jax.random.uniform(km, (B, N)) > 0.2).astype(jnp.float32)

    # Deterministic parameter init (PyTorch-Linear-style uniform bounds).
    bound1 = 1.0 / jnp.sqrt(F)
    w1 = jax.random.uniform(kw1, (F, K), minval=-bound1, maxval=bound1,
                            dtype=jnp.float32)
    b1 = jax.random.uniform(kb1, (K,), minval=-bound1, maxval=bound1,
                            dtype=jnp.float32)
    bound2 = 1.0 / jnp.sqrt(K)
    w2 = jax.random.uniform(kw2, (K, K), minval=-bound2, maxval=bound2,
                            dtype=jnp.float32)
    b2 = jax.random.uniform(kb2, (K,), minval=-bound2, maxval=bound2,
                            dtype=jnp.float32)

    pfeat, pooled_adj, pmask = node_aggregator_forward(
        x, adj, mask, w1, b1, w2, b2, out_nodes=K)
    jax.block_until_ready((pfeat, pooled_adj, pmask))

    # Sanity check against the pure-JAX f32 reference.  Tolerance accounts for
    # bf16 ingest / bf16 MXU operands (f32 accumulation) and the approx
    # reciprocal in the softmax.
    rf, ra, rm = _reference_forward(x, adj, mask, w1, b1, w2, b2, K)
    assert pfeat.shape == (B, K, F) and pooled_adj.shape == (B, K, K)
    assert jnp.allclose(pfeat, rf, rtol=2e-2, atol=2e-2)
    assert jnp.allclose(pooled_adj, ra, rtol=2e-2, atol=2e-2)
    assert jnp.allclose(pmask, rm)

    print("KERNEL_OK")
</pallas_src>

<mosaic_0001>
module attributes {stable_mosaic.version = 11 : i64} {
  func.func @_node_agg_kernel(%arg0: i32, %arg1: memref<1x16x32xbf16, #tpu.memory_space<vmem>>, %arg2: memref<1x16x16xbf16, #tpu.memory_space<vmem>>, %arg3: memref<1x1x16xf32, #tpu.memory_space<vmem>>, %arg4: memref<8x32xbf16, #tpu.memory_space<vmem>>, %arg5: memref<8x1xf32, #tpu.memory_space<vmem>>, %arg6: memref<8x8xbf16, #tpu.memory_space<vmem>>, %arg7: memref<8x1xf32, #tpu.memory_space<vmem>>, %arg8: memref<1x8x32xf32, #tpu.memory_space<vmem>>, %arg9: memref<1x8x8xf32, #tpu.memory_space<vmem>>) attributes {dimension_semantics = [#tpu.dimension_semantics<parallel>], iteration_bounds = array<i64: 2>, scalar_prefetch = 0 : i64, scratch_operands = 0 : i64, tpu.core_type = #tpu.core_type<tc>, window_params = [{transform_indices = @transform_0, window_bounds = array<i64: 1, 16, 32>}, {transform_indices = @transform_1, window_bounds = array<i64: 1, 16, 16>}, {transform_indices = @transform_2, window_bounds = array<i64: 1, 1, 16>}, {pipeline_mode = #tpu.pipeline_mode<synchronous>, transform_indices = @transform_3, window_bounds = array<i64: 8, 32>}, {pipeline_mode = #tpu.pipeline_mode<synchronous>, transform_indices = @transform_4, window_bounds = array<i64: 8, 1>}, {pipeline_mode = #tpu.pipeline_mode<synchronous>, transform_indices = @transform_5, window_bounds = array<i64: 8, 8>}, {pipeline_mode = #tpu.pipeline_mode<synchronous>, transform_indices = @transform_6, window_bounds = array<i64: 8, 1>}, {transform_indices = @transform_7, window_bounds = array<i64: 1, 8, 32>}, {transform_indices = @transform_8, window_bounds = array<i64: 1, 8, 8>}]} {
    %c0 = arith.constant 0 : index
    %c0_0 = arith.constant 0 : index
    %c0_1 = arith.constant 0 : index
    %0 = vector.load %arg1[%c0, %c0_0, %c0_1] : memref<1x16x32xbf16, #tpu.memory_space<vmem>>, vector<1x16x32xbf16>
    %1 = vector.shape_cast %0 : vector<1x16x32xbf16> to vector<16x32xbf16>
    %c0_2 = arith.constant 0 : index
    %c0_3 = arith.constant 0 : index
    %2 = vector.load %arg4[%c0_2, %c0_3] : memref<8x32xbf16, #tpu.memory_space<vmem>>, vector<8x32xbf16>
    %cst = arith.constant dense<0.000000e+00> : vector<8x16xf32>
    %3 = tpu.matmul %2, %1, %cst {dimension_numbers = #tpu.dot_dimension_numbers<[1], [1], [0], [0], [0, 0, 1, 0], [], []>} : vector<8x32xbf16>, vector<16x32xbf16>, vector<8x16xf32> -> vector<8x16xf32>
    %c0_4 = arith.constant 0 : index
    %c0_5 = arith.constant 0 : index
    %4 = vector.load %arg5[%c0_4, %c0_5] : memref<8x1xf32, #tpu.memory_space<vmem>>, vector<8x1xf32>
    %5 = vector.broadcast %4 : vector<8x1xf32> to vector<8x16xf32>
    %6 = arith.addf %3, %5 : vector<8x16xf32>
    %cst_6 = arith.constant 0.000000e+00 : f32
    %7 = vector.broadcast %cst_6 : f32 to vector<8x16xf32>
    %8 = arith.maximumf %6, %7 : vector<8x16xf32>
    %c0_7 = arith.constant 0 : index
    %c0_8 = arith.constant 0 : index
    %9 = vector.load %arg6[%c0_7, %c0_8] : memref<8x8xbf16, #tpu.memory_space<vmem>>, vector<8x8xbf16>
    %10 = arith.truncf %8 : vector<8x16xf32> to vector<8x16xbf16>
    %cst_9 = arith.constant dense<0.000000e+00> : vector<8x16xf32>
    %11 = tpu.matmul %9, %10, %cst_9 {dimension_numbers = #tpu.dot_dimension_numbers<[1], [0], [0], [1], [0, 0, 1, 1], [], []>} : vector<8x8xbf16>, vector<8x16xbf16>, vector<8x16xf32> -> vector<8x16xf32>
    %c0_10 = arith.constant 0 : index
    %c0_11 = arith.constant 0 : index
    %12 = vector.load %arg7[%c0_10, %c0_11] : memref<8x1xf32, #tpu.memory_space<vmem>>, vector<8x1xf32>
    %13 = vector.broadcast %12 : vector<8x1xf32> to vector<8x16xf32>
    %14 = arith.addf %11, %13 : vector<8x16xf32>
    %c0_12 = arith.constant 0 : index
    %c0_13 = arith.constant 0 : index
    %c0_14 = arith.constant 0 : index
    %15 = vector.load %arg3[%c0_12, %c0_13, %c0_14] : memref<1x1x16xf32, #tpu.memory_space<vmem>>, vector<1x1x16xf32>
    %16 = vector.shape_cast %15 : vector<1x1x16xf32> to vector<1x16xf32>
    %cst_15 = arith.constant 0.000000e+00 : f32
    %17 = vector.broadcast %cst_15 : f32 to vector<1x16xf32>
    %18 = arith.cmpf ogt, %16, %17 : vector<1x16xf32>
    %cst_16 = arith.constant -1.000000e+09 : f32
    %19 = vector.shape_cast %18 : vector<1x16xi1> to vector<1x16xi1>
    %20 = vector.broadcast %19 : vector<1x16xi1> to vector<8x16xi1>
    %21 = vector.broadcast %cst_16 : f32 to vector<8x16xf32>
    %22 = arith.select %20, %14, %21 : vector<8x16xi1>, vector<8x16xf32>
    %cst_17 = arith.constant dense<0xFF800000> : vector<16xf32>
    %23 = vector.multi_reduction <maximumf>, %22, %cst_17 [0] : vector<8x16xf32> to vector<16xf32>
    %24 = vector.shape_cast %23 : vector<16xf32> to vector<1x16xf32>
    %25 = vector.broadcast %24 : vector<1x16xf32> to vector<8x16xf32>
    %26 = arith.subf %22, %25 : vector<8x16xf32>
    %27 = math.exp %26 : vector<8x16xf32>
    %cst_18 = arith.constant dense<0.000000e+00> : vector<16xf32>
    %28 = vector.multi_reduction <add>, %27, %cst_18 [0] : vector<8x16xf32> to vector<16xf32>
    %29 = vector.shape_cast %28 : vector<16xf32> to vector<1x16xf32>
    %30 = tpu.reciprocal %29 {approx = true} : vector<1x16xf32> -> vector<1x16xf32>
    %31 = vector.broadcast %30 : vector<1x16xf32> to vector<8x16xf32>
    %32 = arith.mulf %27, %31 : vector<8x16xf32>
    %33 = arith.truncf %32 : vector<8x16xf32> to vector<8x16xbf16>
    %34 = vector.shape_cast %0 : vector<1x16x32xbf16> to vector<16x32xbf16>
    %c0_19 = arith.constant 0 : index
    %c0_20 = arith.constant 0 : index
    %c0_21 = arith.constant 0 : index
    %35 = vector.load %arg2[%c0_19, %c0_20, %c0_21] : memref<1x16x16xbf16, #tpu.memory_space<vmem>>, vector<1x16x16xbf16>
    %36 = vector.shape_cast %35 : vector<1x16x16xbf16> to vector<16x16xbf16>
    %cst_22 = arith.constant dense<0.000000e+00> : vector<8x32xf32>
    %37 = tpu.matmul %33, %34, %cst_22 {dimension_numbers = #tpu.dot_dimension_numbers<[1], [0], [0], [1], [0, 0, 1, 1], [], []>} : vector<8x16xbf16>, vector<16x32xbf16>, vector<8x32xf32> -> vector<8x32xf32>
    %cst_23 = arith.constant dense<0.000000e+00> : vector<8x16xf32>
    %38 = tpu.matmul %33, %36, %cst_23 {dimension_numbers = #tpu.dot_dimension_numbers<[1], [0], [0], [1], [0, 0, 1, 1], [], []>} : vector<8x16xbf16>, vector<16x16xbf16>, vector<8x16xf32> -> vector<8x16xf32>
    %39 = arith.truncf %38 : vector<8x16xf32> to vector<8x16xbf16>
    %cst_24 = arith.constant dense<0.000000e+00> : vector<8x8xf32>
    %40 = tpu.matmul %39, %33, %cst_24 {dimension_numbers = #tpu.dot_dimension_numbers<[1], [1], [0], [0], [0, 0, 1, 0], [], []>} : vector<8x16xbf16>, vector<8x16xbf16>, vector<8x8xf32> -> vector<8x8xf32>
    %cst_25 = arith.constant dense<0.000000e+00> : vector<8xf32>
    %41 = vector.multi_reduction <add>, %40, %cst_25 [1] : vector<8x8xf32> to vector<8xf32>
    %42 = vector.shape_cast %41 : vector<8xf32> to vector<8x1xf32>
    %cst_26 = arith.constant 9.99999971E-10 : f32
    %43 = vector.broadcast %cst_26 : f32 to vector<8x1xf32>
    %44 = arith.addf %42, %43 : vector<8x1xf32>
    %45 = math.rsqrt %44 : vector<8x1xf32>
    %46 = vector.broadcast %45 : vector<8x1xf32> to vector<8x8xf32>
    %47 = arith.mulf %40, %46 : vector<8x8xf32>
    %48 = tpu.transpose %45, [1, 0] : vector<8x1xf32> -> vector<1x8xf32>
    %49 = vector.broadcast %48 : vector<1x8xf32> to vector<8x8xf32>
    %50 = arith.mulf %47, %49 : vector<8x8xf32>
    %c0_27 = arith.constant 0 : index
    %c0_28 = arith.constant 0 : index
    %c0_29 = arith.constant 0 : index
    %51 = vector.load %arg8[%c0_27, %c0_28, %c0_29] : memref<1x8x32xf32, #tpu.memory_space<vmem>>, vector<1x8x32xf32>
    %52 = vector.shape_cast %51 : vector<1x8x32xf32> to vector<8x32xf32>
    %53 = vector.shape_cast %37 : vector<8x32xf32> to vector<1x8x32xf32>
    tpu.vector_store %arg8[%c0_27, %c0_28, %c0_29], %53 {strides = array<i32>} : memref<1x8x32xf32, #tpu.memory_space<vmem>>, vector<1x8x32xf32>,
    %c0_30 = arith.constant 0 : index
    %c0_31 = arith.constant 0 : index
    %c0_32 = arith.constant 0 : index
    %54 = vector.load %arg9[%c0_30, %c0_31, %c0_32] : memref<1x8x8xf32, #tpu.memory_space<vmem>>, vector<1x8x8xf32>
    %55 = vector.shape_cast %54 : vector<1x8x8xf32> to vector<8x8xf32>
    %56 = vector.shape_cast %50 : vector<8x8xf32> to vector<1x8x8xf32>
    tpu.vector_store %arg9[%c0_30, %c0_31, %c0_32], %56 {strides = array<i32>} : memref<1x8x8xf32, #tpu.memory_space<vmem>>, vector<1x8x8xf32>,
    return
  }
  func.func @transform_0(%arg0: i32) -> (i32, i32, i32) {
    %c0_i32 = arith.constant 0 : i32
    %c0_i32_0 = arith.constant 0 : i32
    %c0_i32_1 = arith.constant 0 : i32
    return %arg0, %c0_i32, %c0_i32_0 : i32, i32, i32
  }
  func.func @transform_1(%arg0: i32) -> (i32, i32, i32) {
    %c0_i32 = arith.constant 0 : i32
    %c0_i32_0 = arith.constant 0 : i32
    %c0_i32_1 = arith.constant 0 : i32
    return %arg0, %c0_i32, %c0_i32_0 : i32, i32, i32
  }
  func.func @transform_2(%arg0: i32) -> (i32, i32, i32) {
    %c0_i32 = arith.constant 0 : i32
    %c0_i32_0 = arith.constant 0 : i32
    %c0_i32_1 = arith.constant 0 : i32
    return %arg0, %c0_i32, %c0_i32_0 : i32, i32, i32
  }
  func.func @transform_3(%arg0: i32) -> (i32, i32) {
    %c0_i32 = arith.constant 0 : i32
    %c0_i32_0 = arith.constant 0 : i32
    %c0_i32_1 = arith.constant 0 : i32
    return %c0_i32, %c0_i32_0 : i32, i32
  }
  func.func @transform_4(%arg0: i32) -> (i32, i32) {
    %c0_i32 = arith.constant 0 : i32
    %c0_i32_0 = arith.constant 0 : i32
    %c0_i32_1 = arith.constant 0 : i32
    return %c0_i32, %c0_i32_0 : i32, i32
  }
  func.func @transform_5(%arg0: i32) -> (i32, i32) {
    %c0_i32 = arith.constant 0 : i32
    %c0_i32_0 = arith.constant 0 : i32
    %c0_i32_1 = arith.constant 0 : i32
    return %c0_i32, %c0_i32_0 : i32, i32
  }
  func.func @transform_6(%arg0: i32) -> (i32, i32) {
    %c0_i32 = arith.constant 0 : i32
    %c0_i32_0 = arith.constant 0 : i32
    %c0_i32_1 = arith.constant 0 : i32
    return %c0_i32, %c0_i32_0 : i32, i32
  }
  func.func @transform_7(%arg0: i32) -> (i32, i32, i32) {
    %c0_i32 = arith.constant 0 : i32
    %c0_i32_0 = arith.constant 0 : i32
    %c0_i32_1 = arith.constant 0 : i32
    return %arg0, %c0_i32, %c0_i32_0 : i32, i32, i32
  }
  func.func @transform_8(%arg0: i32) -> (i32, i32, i32) {
    %c0_i32 = arith.constant 0 : i32
    %c0_i32_0 = arith.constant 0 : i32
    %c0_i32_1 = arith.constant 0 : i32
    return %arg0, %c0_i32, %c0_i32_0 : i32, i32, i32
  }
}

</mosaic_0001>

<llo_original>
// kernel: node_aggregator_forward.1
$region0: #{node_aggregator_forward.1}
  #allocation0 [shape = 'u32[]', space=smem, size = 0x4, offset = 0x4, fixed_abs, tag = 'smem constant byte address 0x4 - core index']
  #allocation1 [shape = 'u32[144,128]{1,0:T(1,128)}', space=vmem, size = 0x12000, scoped, tag = 'internal scratch']
  %s0 = inlined_call_operand.vmem [shape: bf16[2,16,32], index: 0, kind: input, shape index: {}]
  %s1 = inlined_call_operand.vmem [shape: bf16[2,16,16], index: 1, kind: input, shape index: {}]
  %s2 = inlined_call_operand.vmem [shape: f32[2,1,16], index: 2, kind: input, shape index: {}]
  %s3 = inlined_call_operand.vmem [shape: bf16[8,32], index: 3, kind: input, shape index: {}]
  %s4 = inlined_call_operand.vmem [shape: f32[8,1], index: 4, kind: input, shape index: {}]
  %s5 = inlined_call_operand.vmem [shape: bf16[8,8], index: 5, kind: input, shape index: {}]
  %s6 = inlined_call_operand.vmem [shape: f32[8,1], index: 6, kind: input, shape index: {}]
  %s7 = inlined_call_operand.hbm [shape: f32[2,8,32], index: 7, kind: output, shape index: {0}]
  %s8 = inlined_call_operand.hbm [shape: f32[2,8,8], index: 8, kind: output, shape index: {1}]
  %9 = xla_tuple %s7, %s8
  %s10 = sld [smem:[#allocation0]]
  $region69: #{node_aggregator_forward.1} parent=0
    _
  %s12 = ssub.s32 1, %s10
  %s13 = scalar_select 0, %s12, %s10
  $region1: #{node_aggregator_forward.1} parent=0
    #allocation2 [shape = 'u8[8192]{0}', space=vmem, size = 0x2000, scoped, tag = 'output window, operand 0']
    #allocation3 [shape = 's32[2]{0}', space=sflag, size = 0x8, scoped, tag = 'scoped memory for node_aggregator_forward.1']
    #allocation4 [shape = 'u8[8192]{0}', space=vmem, size = 0x2000, scoped, tag = 'output window, operand 1']
    #allocation5 [shape = 's32[2]{0}', space=sflag, size = 0x8, scoped, tag = 'scoped memory for node_aggregator_forward.1']
    %14 = vsyncpa [#allocation3], 0
    %s15 = scalar_lea.sflag [#allocation3], 1
    %16 = vsyncpa %s15, 0
    %17 = vsyncpa [#allocation5], 0
    %s18 = scalar_lea.sflag [#allocation5], 1
    %19 = vsyncpa %s18, 0
    loop: start=0, step=1, limit=4
    $region2: #{node_aggregator_forward.1} parent=1 // loop_pre_header
      _
    $region3: #{node_aggregator_forward.1} parent=1 // loop_header
      %s21 = sphi 0, %s25
      %p22 = scmp.ge.s32.totalorder %s21, 4
      %s31 = sphi 0, %s33
      %s34 = sphi 0, %s31
      %s35 = sphi 0, %s34
      %s51 = sphi 0, %s35
      %s57 = sphi 0, %s59
      %s60 = sphi 0, %s57
      %s61 = sphi 0, %s60
      %s77 = sphi 0, %s61
      %s83 = sphi 0, %s85
      %s86 = sphi 0, %s83
      %s87 = sphi 0, %s86
      %s103 = sphi 0, %s87
      %s107 = sphi 0, %s107
      %s109 = sphi 0, %s107
      %s110 = sphi 0, %s109
      %s124 = sphi 0, %s110
      %s128 = sphi 0, %s128
      %s130 = sphi 0, %s128
      %s131 = sphi 0, %s130
      %s145 = sphi 0, %s131
      %s149 = sphi 0, %s149
      %s151 = sphi 0, %s149
      %s152 = sphi 0, %s151
      %s166 = sphi 0, %s152
      %s170 = sphi 0, %s170
      %s172 = sphi 0, %s170
      %s173 = sphi 0, %s172
      %s187 = sphi 0, %s173
      %s193 = sphi 0, %s195
      %s196 = sphi 0, %s193
      %s197 = sphi 0, %s196
      %s213 = sphi 0, %s197
      %s219 = sphi 0, %s221
      %s222 = sphi 0, %s219
      %s223 = sphi 0, %s222
      %s239 = sphi 0, %s223
    $region4: #{node_aggregator_forward.1} parent=1 // loop_header_branch
      %24 = sbr.rel (%p22) target = $region8
    $region5: #{node_aggregator_forward.1} parent=1 // loop_body
      %s26 = ssub.s32 %s21, 1
      %s27 = ssub.s32 %s21, 2
      %s28 = sadd.s32 %s21, 1
      %s29 = ssub.s32 %s21, %s28
      %p30 = scmp.eq.s32.totalorder %s29, 0
      %s32 = sadd.s32 %s31, 1
      %s33 = scalar_select %p30, %s31, %s32
      %p36 = pneg %p30
      %p37 = scmp.eq.s32.totalorder %s21, 1
      %p38 = por %p36, %p37
      %p39 = scmp.ne.s32.totalorder %s31, %s34
      %p40 = scmp.eq.s32.totalorder %s21, 0
      %p41 = por %p39, %p40
      %p42 = scmp.ne.s32.totalorder %s31, %s34
      %p43 = scmp.eq.s32.totalorder %s26, 1
      %p44 = por %p42, %p43
      %p45 = scmp.ne.s32.totalorder %s34, %s35
      %p46 = scmp.eq.s32.totalorder %s26, 0
      %p47 = por %p45, %p46
      %p48 = scmp.ne.s32.totalorder %s34, %s35
      %p49 = scmp.eq.s32.totalorder %s27, 1
      %p50 = por %p48, %p49
      %p52 = scmp.ne.s32.totalorder %s35, %s51
      %p53 = scmp.eq.s32.totalorder %s27, 0
      %p54 = por %p52, %p53
      %s55 = ssub.s32 %s21, %s28
      %p56 = scmp.eq.s32.totalorder %s55, 0
      %s58 = sadd.s32 %s57, 1
      %s59 = scalar_select %p56, %s57, %s58
      %p62 = pneg %p56
      %p63 = scmp.eq.s32.totalorder %s21, 1
      %p64 = por %p62, %p63
      %p65 = scmp.ne.s32.totalorder %s57, %s60
      %p66 = scmp.eq.s32.totalorder %s21, 0
      %p67 = por %p65, %p66
      %p68 = scmp.ne.s32.totalorder %s57, %s60
      %p69 = scmp.eq.s32.totalorder %s26, 1
      %p70 = por %p68, %p69
      %p71 = scmp.ne.s32.totalorder %s60, %s61
      %p72 = scmp.eq.s32.totalorder %s26, 0
      %p73 = por %p71, %p72
      %p74 = scmp.ne.s32.totalorder %s60, %s61
      %p75 = scmp.eq.s32.totalorder %s27, 1
      %p76 = por %p74, %p75
      %p78 = scmp.ne.s32.totalorder %s61, %s77
      %p79 = scmp.eq.s32.totalorder %s27, 0
      %p80 = por %p78, %p79
      %s81 = ssub.s32 %s21, %s28
      %p82 = scmp.eq.s32.totalorder %s81, 0
      %s84 = sadd.s32 %s83, 1
      %s85 = scalar_select %p82, %s83, %s84
      %p88 = pneg %p82
      %p89 = scmp.eq.s32.totalorder %s21, 1
      %p90 = por %p88, %p89
      %p91 = scmp.ne.s32.totalorder %s83, %s86
      %p92 = scmp.eq.s32.totalorder %s21, 0
      %p93 = por %p91, %p92
      %p94 = scmp.ne.s32.totalorder %s83, %s86
      %p95 = scmp.eq.s32.totalorder %s26, 1
      %p96 = por %p94, %p95
      %p97 = scmp.ne.s32.totalorder %s86, %s87
      %p98 = scmp.eq.s32.totalorder %s26, 0
      %p99 = por %p97, %p98
      %p100 = scmp.ne.s32.totalorder %s86, %s87
      %p101 = scmp.eq.s32.totalorder %s27, 1
      %p102 = por %p100, %p101
      %p104 = scmp.ne.s32.totalorder %s87, %s103
      %p105 = scmp.eq.s32.totalorder %s27, 0
      %p106 = por %p104, %p105
      %s108 = sadd.s32 %s107, 1
      %p111 = scmp.eq.s32.totalorder %s21, 1
      %p112 = scmp.ne.s32.totalorder %s107, %s109
      %p113 = scmp.eq.s32.totalorder %s21, 0
      %p114 = por %p112, %p113
      %p115 = scmp.ne.s32.totalorder %s107, %s109
      %p116 = scmp.eq.s32.totalorder %s26, 1
      %p117 = por %p115, %p116
      %p118 = scmp.ne.s32.totalorder %s109, %s110
      %p119 = scmp.eq.s32.totalorder %s26, 0
      %p120 = por %p118, %p119
      %p121 = scmp.ne.s32.totalorder %s109, %s110
      %p122 = scmp.eq.s32.totalorder %s27, 1
      %p123 = por %p121, %p122
      %p125 = scmp.ne.s32.totalorder %s110, %s124
      %p126 = scmp.eq.s32.totalorder %s27, 0
      %p127 = por %p125, %p126
      %s129 = sadd.s32 %s128, 1
      %p132 = scmp.eq.s32.totalorder %s21, 1
      %p133 = scmp.ne.s32.totalorder %s128, %s130
      %p134 = scmp.eq.s32.totalorder %s21, 0
      %p135 = por %p133, %p134
      %p136 = scmp.ne.s32.totalorder %s128, %s130
      %p137 = scmp.eq.s32.totalorder %s26, 1
      %p138 = por %p136, %p137
      %p139 = scmp.ne.s32.totalorder %s130, %s131
      %p140 = scmp.eq.s32.totalorder %s26, 0
      %p141 = por %p139, %p140
      %p142 = scmp.ne.s32.totalorder %s130, %s131
      %p143 = scmp.eq.s32.totalorder %s27, 1
      %p144 = por %p142, %p143
      %p146 = scmp.ne.s32.totalorder %s131, %s145
      %p147 = scmp.eq.s32.totalorder %s27, 0
      %p148 = por %p146, %p147
      %s150 = sadd.s32 %s149, 1
      %p153 = scmp.eq.s32.totalorder %s21, 1
      %p154 = scmp.ne.s32.totalorder %s149, %s151
      %p155 = scmp.eq.s32.totalorder %s21, 0
      %p156 = por %p154, %p155
      %p157 = scmp.ne.s32.totalorder %s149, %s151
      %p158 = scmp.eq.s32.totalorder %s26, 1
      %p159 = por %p157, %p158
      %p160 = scmp.ne.s32.totalorder %s151, %s152
      %p161 = scmp.eq.s32.totalorder %s26, 0
      %p162 = por %p160, %p161
      %p163 = scmp.ne.s32.totalorder %s151, %s152
      %p164 = scmp.eq.s32.totalorder %s27, 1
      %p165 = por %p163, %p164
      %p167 = scmp.ne.s32.totalorder %s152, %s166
      %p168 = scmp.eq.s32.totalorder %s27, 0
      %p169 = por %p167, %p168
      %s171 = sadd.s32 %s170, 1
      %p174 = scmp.eq.s32.totalorder %s21, 1
      %p175 = scmp.ne.s32.totalorder %s170, %s172
      %p176 = scmp.eq.s32.totalorder %s21, 0
      %p177 = por %p175, %p176
      %p178 = scmp.ne.s32.totalorder %s170, %s172
      %p179 = scmp.eq.s32.totalorder %s26, 1
      %p180 = por %p178, %p179
      %p181 = scmp.ne.s32.totalorder %s172, %s173
      %p182 = scmp.eq.s32.totalorder %s26, 0
      %p183 = por %p181, %p182
      %p184 = scmp.ne.s32.totalorder %s172, %s173
      %p185 = scmp.eq.s32.totalorder %s27, 1
      %p186 = por %p184, %p185
      %p188 = scmp.ne.s32.totalorder %s173, %s187
      %p189 = scmp.eq.s32.totalorder %s27, 0
      %p190 = por %p188, %p189
      %s191 = ssub.s32 %s21, %s28
      %p192 = scmp.eq.s32.totalorder %s191, 0
      %s194 = sadd.s32 %s193, 1
      %s195 = scalar_select %p192, %s193, %s194
      %p198 = pneg %p192
      %p199 = scmp.eq.s32.totalorder %s21, 1
      %p200 = por %p198, %p199
      %p201 = scmp.ne.s32.totalorder %s193, %s196
      %p202 = scmp.eq.s32.totalorder %s21, 0
      %p203 = por %p201, %p202
      %p204 = scmp.ne.s32.totalorder %s193, %s196
      %p205 = scmp.eq.s32.totalorder %s26, 1
      %p206 = por %p204, %p205
      %p207 = scmp.ne.s32.totalorder %s196, %s197
      %p208 = scmp.eq.s32.totalorder %s26, 0
      %p209 = por %p207, %p208
      %p210 = scmp.ne.s32.totalorder %s196, %s197
      %p211 = scmp.eq.s32.totalorder %s27, 1
      %p212 = por %p210, %p211
      %p214 = scmp.ne.s32.totalorder %s197, %s213
      %p215 = scmp.eq.s32.totalorder %s27, 0
      %p216 = por %p214, %p215
      %s217 = ssub.s32 %s21, %s28
      %p218 = scmp.eq.s32.totalorder %s217, 0
      %s220 = sadd.s32 %s219, 1
      %s221 = scalar_select %p218, %s219, %s220
      %p224 = pneg %p218
      %p225 = scmp.eq.s32.totalorder %s21, 1
      %p226 = por %p224, %p225
      %p227 = scmp.ne.s32.totalorder %s219, %s222
      %p228 = scmp.eq.s32.totalorder %s21, 0
      %p229 = por %p227, %p228
      %p230 = scmp.ne.s32.totalorder %s219, %s222
      %p231 = scmp.eq.s32.totalorder %s26, 1
      %p232 = por %p230, %p231
      %p233 = scmp.ne.s32.totalorder %s222, %s223
      %p234 = scmp.eq.s32.totalorder %s26, 0
      %p235 = por %p233, %p234
      %p236 = scmp.ne.s32.totalorder %s222, %s223
      %p237 = scmp.eq.s32.totalorder %s27, 1
      %p238 = por %p236, %p237
      %p240 = scmp.ne.s32.totalorder %s223, %s239
      %p241 = scmp.eq.s32.totalorder %s27, 0
      %p242 = por %p240, %p241
      %p243 = scmp.le.s32.totalorder 1, %s21
      %p244 = scmp.lt.s32.totalorder %s21, 3
      %p245 = pnand %p243, %p244
      %p246 = pneg %p245
      // Predicated region
      $region9: #{node_aggregator_forward.1} parent=5 // pred_check
        _
      $region10: #{node_aggregator_forward.1} parent=5 // pred_check_branch
        %248 = sbr.rel (%p245) target = $region12
      $region11: #{node_aggregator_forward.1} parent=5 // pred_region
        %s249 = ssub.s32 %s21, 1
        // Predicated region
        $region13: #{node_aggregator_forward.1} parent=11 // pred_check
          %p250 = pneg %p120
        $region14: #{node_aggregator_forward.1} parent=11 // pred_check_branch
          %252 = sbr.rel (%p250) target = $region16
        $region15: #{node_aggregator_forward.1} parent=11 // pred_region
          _
        $region16: #{node_aggregator_forward.1} parent=11 // pred_fallthru
          _
        // Predicated region
        $region17: #{node_aggregator_forward.1} parent=11 // pred_check
          %p253 = pneg %p141
        $region18: #{node_aggregator_forward.1} parent=11 // pred_check_branch
          %255 = sbr.rel (%p253) target = $region20
        $region19: #{node_aggregator_forward.1} parent=11 // pred_region
          _
        $region20: #{node_aggregator_forward.1} parent=11 // pred_fallthru
          _
        // Predicated region
        $region21: #{node_aggregator_forward.1} parent=11 // pred_check
          %p256 = pneg %p162
        $region22: #{node_aggregator_forward.1} parent=11 // pred_check_branch
          %258 = sbr.rel (%p256) target = $region24
        $region23: #{node_aggregator_forward.1} parent=11 // pred_region
          _
        $region24: #{node_aggregator_forward.1} parent=11 // pred_fallthru
          _
        // Predicated region
        $region25: #{node_aggregator_forward.1} parent=11 // pred_check
          %p259 = pneg %p183
        $region26: #{node_aggregator_forward.1} parent=11 // pred_check_branch
          %261 = sbr.rel (%p259) target = $region28
        $region27: #{node_aggregator_forward.1} parent=11 // pred_region
          _
        $region28: #{node_aggregator_forward.1} parent=11 // pred_fallthru
          _
      $region12: #{node_aggregator_forward.1} parent=5 // pred_fallthru
        _
      %p262 = scmp.lt.s32.totalorder %s21, 2
      // Predicated region
      $region29: #{node_aggregator_forward.1} parent=5 // pred_check
        %p263 = pneg %p262
      $region30: #{node_aggregator_forward.1} parent=5 // pred_check_branch
        %265 = sbr.rel (%p263) target = $region32
      $region31: #{node_aggregator_forward.1} parent=5 // pred_region
        // Predicated region
        $region33: #{node_aggregator_forward.1} parent=31 // pred_check
          %p266 = pneg %p41
        $region34: #{node_aggregator_forward.1} parent=31 // pred_check_branch
          %268 = sbr.rel (%p266) target = $region36
        $region35: #{node_aggregator_forward.1} parent=31 // pred_region
          %p269 = scmp.lt.s32.totalorder %s21, 1
          %s270 = scalar_select %p269, %s21, 1
          %s271 = smul.addr %s270, 2
          %s272 = smul.addr %s271, 4
          %s273 = scalar_lea.vmem %s0, %s272
        $region36: #{node_aggregator_forward.1} parent=31 // pred_fallthru
          _
        // Predicated region
        $region37: #{node_aggregator_forward.1} parent=31 // pred_check
          %p274 = pneg %p67
        $region38: #{node_aggregator_forward.1} parent=31 // pred_check_branch
          %276 = sbr.rel (%p274) target = $region40
        $region39: #{node_aggregator_forward.1} parent=31 // pred_region
          %p277 = scmp.lt.s32.totalorder %s21, 1
          %s278 = scalar_select %p277, %s21, 1
          %s279 = smul.addr %s278, 2
          %s280 = smul.addr %s279, 4
          %s281 = scalar_lea.vmem %s1, %s280
        $region40: #{node_aggregator_forward.1} parent=31 // pred_fallthru
          _
        // Predicated region
        $region41: #{node_aggregator_forward.1} parent=31 // pred_check
          %p282 = pneg %p93
        $region42: #{node_aggregator_forward.1} parent=31 // pred_check_branch
          %284 = sbr.rel (%p282) target = $region44
        $region43: #{node_aggregator_forward.1} parent=31 // pred_region
          %p285 = scmp.lt.s32.totalorder %s21, 1
          %s286 = scalar_select %p285, %s21, 1
          %s287 = scalar_lea.vmem %s2, %s286
        $region44: #{node_aggregator_forward.1} parent=31 // pred_fallthru
          _
      $region32: #{node_aggregator_forward.1} parent=5 // pred_fallthru
        _
      %p288 = scmp.le.s32.totalorder 1, %s21
      %p289 = scmp.lt.s32.totalorder %s21, 3
      %p290 = pnand %p288, %p289
      %p291 = pneg %p290
      // Predicated region
      $region45: #{node_aggregator_forward.1} parent=5 // pred_check
        _
      $region46: #{node_aggregator_forward.1} parent=5 // pred_check_branch
        %293 = sbr.rel (%p290) target = $region48
      $region47: #{node_aggregator_forward.1} parent=5 // pred_region
        %s294 = ssub.s32 %s21, 1
        %p295 = scmp.lt.s32.totalorder %s26, 1
        %s296 = scalar_select %p295, %s26, 1
        %s297 = smul.addr %s296, 2
        %s298 = smul.addr %s297, 4
        %s299 = scalar_lea.vmem %s0, %s298
        %p300 = pneg %p47
        %p301 = pneg %p44
        %p302 = scmp.lt.s32.totalorder %s26, 1
        %s303 = scalar_select %p302, %s26, 1
        %s304 = smul.addr %s303, 2
        %s305 = smul.addr %s304, 4
        %s306 = scalar_lea.vmem %s1, %s305
        %p307 = pneg %p73
        %p308 = pneg %p70
        %p309 = scmp.lt.s32.totalorder %s26, 1
        %s310 = scalar_select %p309, %s26, 1
        %s311 = scalar_lea.vmem %s2, %s310
        %p312 = pneg %p99
        %p313 = pneg %p96
        %p314 = pneg %p120
        %p315 = pneg %p117
        %p316 = pneg %p141
        %p317 = pneg %p138
        %p318 = pneg %p162
        %p319 = pneg %p159
        %p320 = pneg %p183
        %p321 = pneg %p180
        %p322 = pneg %p209
        %p323 = pneg %p206
        %s324 = sand.u32 %s196, 1
        %s325 = scalar_lea.sflag [#allocation3], %s324
        %s326 = sand.u32 %s196, 1
        %s327 = smul.addr %s326, 8
        %s328 = scalar_lea.vmem [#allocation2], %s327
        %p329 = pneg %p235
        %p330 = pneg %p232
        %s331 = sand.u32 %s222, 1
        %s332 = scalar_lea.sflag [#allocation5], %s331
        %s333 = sand.u32 %s222, 1
        %s334 = smul.addr %s333, 8
        %s335 = scalar_lea.vmem [#allocation4], %s334
        %p336 = scmp.lt.s32.totalorder %s26, 1
        %s337 = scalar_select %p336, %s26, 1
        %s338 = smul.addr %s337, 2
        %s339 = smul.addr %s338, 4
        %s340 = scalar_lea.vmem %s0, %s339
        %p341 = scmp.lt.s32.totalorder %s26, 1
        %s342 = scalar_select %p341, %s26, 1
        %s343 = smul.addr %s342, 2
        %s344 = smul.addr %s343, 4
        %s345 = scalar_lea.vmem %s1, %s344
        %p346 = scmp.lt.s32.totalorder %s26, 1
        %s347 = scalar_select %p346, %s26, 1
        %s348 = scalar_lea.vmem %s2, %s347
        %v350 = vld [vmem:[%s340] sm:$0xf]
        %v351 = vld [vmem:[%s340 + $0x4] sm:$0xf]
        %v352 = vld [vmem:[%s3] sm:$0xf]
        %v353 = vld [vmem:[%s4] sm:$0xff]
        %355 = vset.pattern.permute.xlu0 0
        %356 = vperm.xlu0 %355, %v353
        %v357 = vpop.permute.xlu0 %356
        %v361 = vunpack.c.l.b16 %v350
        %v362 = vunpack.c.l.b16 %v351
        %v363 = vpack.c.b16 %v362, %v361
        %vm364 = vcmask 261120
        %v366 = vsel %vm364, %v352, 0
        %v369 = vsel %vm364, %v363, 0
        %371 = vmatprep.subr.bf16.mxu0 0
        %372 = vmatpush1.bf16.xpose.msra.mxu0 0
        %373 = vmatprep.subr.bf16.mxu0 0
        %374 = vmatpush1.bf16.xpose.msra.mxu0 0
        %375 = vmatprep.subr.bf16.mxu0 0
        %376 = vmatpush1.bf16.xpose.msra.mxu0 0
        %377 = vmatprep.subr.bf16.mxu0 0
        %378 = vmatpush1.bf16.xpose.msra.mxu0 0
        %379 = vmatprep.subr.bf16.mxu0 0
        %380 = vmatpush1.bf16.xpose.msra.mxu0 0
        %381 = vmatprep.subr.bf16.mxu0 0
        %382 = vmatpush1.bf16.xpose.msra.mxu0 0
        %383 = vmatprep.subr.bf16.mxu0 0
        %384 = vmatpush1.bf16.xpose.msra.mxu0 0
        %385 = vmatprep.subr.bf16.mxu0 0
        %386 = vmatpush1.bf16.xpose.msra.mxu0 %v369
        %387 = vmatprep.subr.bf16.mxu0 0
        %388 = vmatpush2.bf16.xpose.msra.mxu0 0
        %389 = vmatprep.subr.bf16.mxu0 0
        %390 = vmatpush2.bf16.xpose.msra.mxu0 0
        %391 = vmatprep.subr.bf16.mxu0 0
        %392 = vmatpush2.bf16.xpose.msra.mxu0 0
        %393 = vmatprep.subr.bf16.mxu0 0
        %394 = vmatpush2.bf16.xpose.msra.mxu0 0
        %395 = vmatprep.subr.bf16.mxu0 0
        %396 = vmatpush2.bf16.xpose.msra.mxu0 0
        %397 = vmatprep.subr.bf16.mxu0 0
        %398 = vmatpush2.bf16.xpose.msra.mxu0 0
        %399 = vmatprep.subr.bf16.mxu0 0
        %400 = vmatpush2.bf16.xpose.msra.mxu0 0
        %401 = vmatprep.subr.bf16.mxu0 0
        %402 = vmatpush2.bf16.xpose.msra.mxu0 0
        %403 = vmatprep.mubr.bf16.mxu0 0
        %404 = vmatmul.mubr.bf16.gmra.mxu0 %v366
        %v405 = vpop.f32.mrf.mxu0
        %v406 = vadd.f32 %v357, %v405
        %v407 = vpop.f32.mrf.mxu0
        %v408 = vpop.f32.mrf.mxu0
        %v409 = vpop.f32.mrf.mxu0
        %410 = vdwg.mxu0
        %v411 = vmax.f32 %v406, 0.0
        %v412 = vld [vmem:[%s5] sm:$0xf]
        %v413 = vpack.c.bf16 %v411, %v411
        %v414 = vld [vmem:[%s6] sm:$0xff]
        %416 = vset.pattern.permute.xlu0 0
        %417 = vperm.xlu0 %416, %v414
        %v418 = vpop.permute.xlu0 %417
        %vm420 = vcmask 64512
        %v422 = vsel %vm420, %v412, 0
        %vm424 = vcmask 1043456
        %v426 = vsel %vm424, %v413, 0
        %428 = vmatprep.subr.bf16.mxu0 0
        %429 = vmatpush1.bf16.msra.mxu0 0
        %430 = vmatprep.subr.bf16.mxu0 0
        %431 = vmatpush1.bf16.msra.mxu0 0
        %432 = vmatprep.subr.bf16.mxu0 0
        %433 = vmatpush1.bf16.msra.mxu0 0
        %434 = vmatprep.subr.bf16.mxu0 0
        %435 = vmatpush1.bf16.msra.mxu0 0
        %436 = vmatprep.subr.bf16.mxu0 0
        %437 = vmatpush1.bf16.msra.mxu0 0
        %438 = vmatprep.subr.bf16.mxu0 0
        %439 = vmatpush1.bf16.msra.mxu0 0
        %440 = vmatprep.subr.bf16.mxu0 0
        %441 = vmatpush1.bf16.msra.mxu0 0
        %442 = vmatprep.subr.bf16.mxu0 0
        %443 = vmatpush1.bf16.msra.mxu0 %v426
        %444 = vmatprep.subr.bf16.mxu0 0
        %445 = vmatpush2.bf16.msra.mxu0 0
        %446 = vmatprep.subr.bf16.mxu0 0
        %447 = vmatpush2.bf16.msra.mxu0 0
        %448 = vmatprep.subr.bf16.mxu0 0
        %449 = vmatpush2.bf16.msra.mxu0 0
        %450 = vmatprep.subr.bf16.mxu0 0
        %451 = vmatpush2.bf16.msra.mxu0 0
        %452 = vmatprep.subr.bf16.mxu0 0
        %453 = vmatpush2.bf16.msra.mxu0 0
        %454 = vmatprep.subr.bf16.mxu0 0
        %455 = vmatpush2.bf16.msra.mxu0 0
        %456 = vmatprep.subr.bf16.mxu0 0
        %457 = vmatpush2.bf16.msra.mxu0 0
        %458 = vmatprep.subr.bf16.mxu0 0
        %459 = vmatpush2.bf16.msra.mxu0 0
        %460 = vmatprep.mubr.bf16.mxu0 0
        %461 = vmatmul.mubr.bf16.gmra.mxu0 %v422
        %v462 = vpop.f32.mrf.mxu0
        %v463 = vadd.f32 %v418, %v462
        %v464 = vpop.f32.mrf.mxu0
        %v465 = vpop.f32.mrf.mxu0
        %v466 = vpop.f32.mrf.mxu0
        %467 = vdwg.mxu0
        %v468 = vld [vmem:[%s348] sm:$0x1]
        %vm469 = vcmp.gt.f32.partialorder %v468, 0.0
        %v470 = vsel %vm469, 1, 0
        %v471 = vlaneseq
        %v472 = vshrl.u32 %v471, 7
        %v473 = vsub.s32 0, %v472
        %v474 = vrot.slane %v470, %v473
        %vm475 = vcmp.eq.s32.totalorder %v474, 1
        %v476 = vsel %vm475, %v463, -1e+09
        %vm477 = vcmask 130048
        %v478 = vsel %vm477, %v476, -inf
        %v479 = vrot.slane %v478, 4
        %v480 = vmax.f32 %v478, %v479
        %v481 = vrot.slane %v480, 2
        %v482 = vmax.f32 %v480, %v481
        %v483 = vrot.slane %v482, 1
        %v484 = vmax.f32 %v482, %v483
        %v485 = vsub.f32 %v476, %v484
        %v486 = vmul.f32 %v485, 1.442695
        %v487 = vpow.pop %v486
        %v488 = vsel %vm477, %v487, 0.0
        %v489 = vrot.slane %v488, 4
        %v490 = vadd.f32 %v488, %v489
        %v491 = vrot.slane %v490, 2
        %v492 = vadd.f32 %v490, %v491
        %v493 = vrot.slane %v492, 1
        %v494 = vadd.f32 %v492, %v493
        %v495 = vrcp.pop %v494
        %v496 = vmul.f32 %v487, %v495
        %v497 = vpack.c.bf16 %v496, %v496
        %v498 = vld [vmem:[%s345] sm:$0xf]
        %v499 = vld [vmem:[%s345 + $0x4] sm:$0xf]
        %v502 = vsel %vm477, %v497, 0
        %504 = vmatprep.subr.bf16.mxu0 0
        %505 = vmatpush1.bf16.msra.mxu0 0
        %506 = vmatprep.subr.bf16.mxu0 0
        %507 = vmatpush1.bf16.msra.mxu0 0
        %508 = vmatprep.subr.bf16.mxu0 0
        %509 = vmatpush1.bf16.msra.mxu0 0
        %510 = vmatprep.subr.bf16.mxu0 0
        %511 = vmatpush1.bf16.msra.mxu0 0
        %512 = vmatprep.subr.bf16.mxu0 0
        %513 = vmatpush1.bf16.msra.mxu0 0
        %514 = vmatprep.subr.bf16.mxu0 0
        %515 = vmatpush1.bf16.msra.mxu0 0
        %516 = vmatprep.subr.bf16.mxu0 0
        %517 = vmatpush1.bf16.msra.mxu0 0
        %518 = vmatprep.subr.bf16.mxu0 0
        %519 = vmatpush1.bf16.msra.mxu0 %v363
        %520 = vmatprep.subr.bf16.mxu0 0
        %521 = vmatpush2.bf16.msra.mxu0 0
        %522 = vmatprep.subr.bf16.mxu0 0
        %523 = vmatpush2.bf16.msra.mxu0 0
        %524 = vmatprep.subr.bf16.mxu0 0
        %525 = vmatpush2.bf16.msra.mxu0 0
        %526 = vmatprep.subr.bf16.mxu0 0
        %527 = vmatpush2.bf16.msra.mxu0 0
        %528 = vmatprep.subr.bf16.mxu0 0
        %529 = vmatpush2.bf16.msra.mxu0 0
        %530 = vmatprep.subr.bf16.mxu0 0
        %531 = vmatpush2.bf16.msra.mxu0 0
        %532 = vmatprep.subr.bf16.mxu0 0
        %533 = vmatpush2.bf16.msra.mxu0 0
        %534 = vmatprep.subr.bf16.mxu0 0
        %535 = vmatpush2.bf16.msra.mxu0 0
        %536 = vmatprep.mubr.bf16.mxu0 0
        %537 = vmatmul.mubr.bf16.gmra.mxu0 %v502
        %v538 = vpop.f32.mrf.mxu0
        %v539 = vadd.f32 0.0, %v538
        %v540 = vpop.f32.mrf.mxu0
        %v541 = vpop.f32.mrf.mxu0
        %v542 = vpop.f32.mrf.mxu0
        %543 = vdwg.mxu0
        %v546 = vunpack.c.l.b16 %v498
        %v547 = vunpack.c.l.b16 %v499
        %v548 = vpack.c.b16 %v547, %v546
        %550 = vmatprep.subr.bf16.mxu0 0
        %551 = vmatpush1.bf16.msra.mxu0 0
        %552 = vmatprep.subr.bf16.mxu0 0
        %553 = vmatpush1.bf16.msra.mxu0 0
        %554 = vmatprep.subr.bf16.mxu0 0
        %555 = vmatpush1.bf16.msra.mxu0 0
        %556 = vmatprep.subr.bf16.mxu0 0
        %557 = vmatpush1.bf16.msra.mxu0 0
        %558 = vmatprep.subr.bf16.mxu0 0
        %559 = vmatpush1.bf16.msra.mxu0 0
        %560 = vmatprep.subr.bf16.mxu0 0
        %561 = vmatpush1.bf16.msra.mxu0 0
        %562 = vmatprep.subr.bf16.mxu0 0
        %563 = vmatpush1.bf16.msra.mxu0 0
        %564 = vmatprep.subr.bf16.mxu0 0
        %565 = vmatpush1.bf16.msra.mxu0 %v548
        %566 = vmatprep.subr.bf16.mxu0 0
        %567 = vmatpush2.bf16.msra.mxu0 0
        %568 = vmatprep.subr.bf16.mxu0 0
        %569 = vmatpush2.bf16.msra.mxu0 0
        %570 = vmatprep.subr.bf16.mxu0 0
        %571 = vmatpush2.bf16.msra.mxu0 0
        %572 = vmatprep.subr.bf16.mxu0 0
        %573 = vmatpush2.bf16.msra.mxu0 0
        %574 = vmatprep.subr.bf16.mxu0 0
        %575 = vmatpush2.bf16.msra.mxu0 0
        %576 = vmatprep.subr.bf16.mxu0 0
        %577 = vmatpush2.bf16.msra.mxu0 0
        %578 = vmatprep.subr.bf16.mxu0 0
        %579 = vmatpush2.bf16.msra.mxu0 0
        %580 = vmatprep.subr.bf16.mxu0 0
        %581 = vmatpush2.bf16.msra.mxu0 0
        %582 = vmatprep.mubr.bf16.mxu0 0
        %583 = vmatmul.mubr.bf16.gmra.mxu0 %v502
        %v584 = vpop.f32.mrf.mxu0
        %v585 = vadd.f32 0.0, %v584
        %v586 = vpop.f32.mrf.mxu0
        %v587 = vpop.f32.mrf.mxu0
        %v588 = vpop.f32.mrf.mxu0
        %589 = vdwg.mxu0
        %v590 = vpack.c.bf16 %v585, %v585
        %v592 = vsel %vm477, %v590, 0
        %594 = vmatprep.subr.bf16.mxu0 0
        %595 = vmatpush1.bf16.xpose.msra.mxu0 0
        %596 = vmatprep.subr.bf16.mxu0 0
        %597 = vmatpush1.bf16.xpose.msra.mxu0 0
        %598 = vmatprep.subr.bf16.mxu0 0
        %599 = vmatpush1.bf16.xpose.msra.mxu0 0
        %600 = vmatprep.subr.bf16.mxu0 0
        %601 = vmatpush1.bf16.xpose.msra.mxu0 0
        %602 = vmatprep.subr.bf16.mxu0 0
        %603 = vmatpush1.bf16.xpose.msra.mxu0 0
        %604 = vmatprep.subr.bf16.mxu0 0
        %605 = vmatpush1.bf16.xpose.msra.mxu0 0
        %606 = vmatprep.subr.bf16.mxu0 0
        %607 = vmatpush1.bf16.xpose.msra.mxu0 0
        %608 = vmatprep.subr.bf16.mxu0 0
        %609 = vmatpush1.bf16.xpose.msra.mxu0 %v502
        %610 = vmatprep.subr.bf16.mxu0 0
        %611 = vmatpush2.bf16.xpose.msra.mxu0 0
        %612 = vmatprep.subr.bf16.mxu0 0
        %613 = vmatpush2.bf16.xpose.msra.mxu0 0
        %614 = vmatprep.subr.bf16.mxu0 0
        %615 = vmatpush2.bf16.xpose.msra.mxu0 0
        %616 = vmatprep.subr.bf16.mxu0 0
        %617 = vmatpush2.bf16.xpose.msra.mxu0 0
        %618 = vmatprep.subr.bf16.mxu0 0
        %619 = vmatpush2.bf16.xpose.msra.mxu0 0
        %620 = vmatprep.subr.bf16.mxu0 0
        %621 = vmatpush2.bf16.xpose.msra.mxu0 0
        %622 = vmatprep.subr.bf16.mxu0 0
        %623 = vmatpush2.bf16.xpose.msra.mxu0 0
        %624 = vmatprep.subr.bf16.mxu0 0
        %625 = vmatpush2.bf16.xpose.msra.mxu0 0
        %626 = vmatprep.mubr.bf16.mxu0 0
        %627 = vmatmul.mubr.bf16.gmra.mxu0 %v592
        %v628 = vpop.f32.mrf.mxu0
        %v629 = vadd.f32 0.0, %v628
        %v630 = vpop.f32.mrf.mxu0
        %v631 = vpop.f32.mrf.mxu0
        %v632 = vpop.f32.mrf.mxu0
        %633 = vdwg.mxu0
        %v634 = vsel %vm420, %v629, 0.0
        %635 = vadd.xlane.f32.xlu0 %v634
        %v636 = vpop.xlane.xlu0 %635
        %v637 = vadd.f32 %v636, 1e-09
        %v638 = vrsqrt.pop %v637
        %v639 = vmul.f32 %v629, %v638
        %640 = vxpose.xlu0.b32.start [1/16] %v638, 128
        %641 = vxpose.xlu0.b32.cont [2/16] 0.0, 128
        %642 = vxpose.xlu0.b32.cont [3/16] 0.0, 128
        %643 = vxpose.xlu0.b32.cont [4/16] 0.0, 128
        %644 = vxpose.xlu0.b32.cont [5/16] 0.0, 128
        %645 = vxpose.xlu0.b32.cont [6/16] 0.0, 128
        %646 = vxpose.xlu0.b32.cont [7/16] 0.0, 128
        %647 = vxpose.xlu0.b32.cont [8/16] 0.0, 128
        %648 = vxpose.xlu0.b32.cont [9/16] 0.0, 128
        %649 = vxpose.xlu0.b32.cont [10/16] 0.0, 128
        %650 = vxpose.xlu0.b32.cont [11/16] 0.0, 128
        %651 = vxpose.xlu0.b32.cont [12/16] 0.0, 128
        %652 = vxpose.xlu0.b32.cont [13/16] 0.0, 128
        %653 = vxpose.xlu0.b32.cont [14/16] 0.0, 128
        %654 = vxpose.xlu0.b32.cont [15/16] 0.0, 128
        %655 = vxpose.xlu0.b32.end [16/16] 0.0, 128
        %v656 = vpop.trf.xlu0
        %v657 = vpop.trf.xlu0
        %v658 = vpop.trf.xlu0
        %v659 = vpop.trf.xlu0
        %v660 = vpop.trf.xlu0
        %v661 = vpop.trf.xlu0
        %v662 = vpop.trf.xlu0
        %v663 = vpop.trf.xlu0
        %v664 = vpop.trf.xlu0
        %v665 = vpop.trf.xlu0
        %v666 = vpop.trf.xlu0
        %v667 = vpop.trf.xlu0
        %v668 = vpop.trf.xlu0
        %v669 = vpop.trf.xlu0
        %v670 = vpop.trf.xlu0
        %v671 = vpop.trf.xlu0
        %v672 = vlaneseq
        %v673 = vshrl.u32 %v672, 7
        %v674 = vsub.s32 0, %v673
        %v675 = vrot.slane %v656, %v674
        %v676 = vmul.f32 %v639, %v675
        %677 = vst.msk [vmem:[%s328] sm:$0xff] %vm364, %v539
        %678 = vst.msk [vmem:[%s335] sm:$0xff] %vm420, %v676
        %s679 = sand.u32 %s196, 1
        %s680 = scalar_lea.sflag [#allocation3], %s679
        %s681 = sand.u32 %s196, 1
        %s682 = smul.addr %s681, 8
        %s683 = scalar_lea.vmem [#allocation2], %s682
        %s684 = sand.u32 %s222, 1
        %s685 = scalar_lea.sflag [#allocation5], %s684
        %s686 = sand.u32 %s222, 1
        %s687 = smul.addr %s686, 8
        %s688 = scalar_lea.vmem [#allocation4], %s687
        // Predicated region
        $region49: #{node_aggregator_forward.1} parent=47 // pred_check
          %p689 = pneg %p206
        $region50: #{node_aggregator_forward.1} parent=47 // pred_check_branch
          %691 = sbr.rel (%p689) target = $region52
        $region51: #{node_aggregator_forward.1} parent=47 // pred_region
          %s693 = ssub.s32 128, 128
          %694 = vsyncadd %s680, %s693
          %s695 = smul.addr %s26, 128
          %s696 = scalar_lea.hbm %s7, %s695
          %s698 = sshll.u32 %s683, 4
          %s699 = int_to_ptr.vmem [resolvable:$true] %s698
          %701 = dma.vmem_to_hbm [thread:$0]  %s699, 128, %s696, %s680
        $region52: #{node_aggregator_forward.1} parent=47 // pred_fallthru
          _
        // Predicated region
        $region53: #{node_aggregator_forward.1} parent=47 // pred_check
          %p702 = pneg %p232
        $region54: #{node_aggregator_forward.1} parent=47 // pred_check_branch
          %704 = sbr.rel (%p702) target = $region56
        $region55: #{node_aggregator_forward.1} parent=47 // pred_region
          %s706 = ssub.s32 128, 128
          %707 = vsyncadd %s685, %s706
          %s708 = smul.addr %s26, 128
          %s709 = scalar_lea.hbm %s8, %s708
          %s711 = sshll.u32 %s688, 4
          %s712 = int_to_ptr.vmem [resolvable:$true] %s711
          %714 = dma.vmem_to_hbm [thread:$0]  %s712, 128, %s709, %s685
        $region56: #{node_aggregator_forward.1} parent=47 // pred_fallthru
          _
      $region48: #{node_aggregator_forward.1} parent=5 // pred_fallthru
        _
      %p715 = scmp.le.s32.totalorder 2, %s21
      // Predicated region
      $region57: #{node_aggregator_forward.1} parent=5 // pred_check
        %p716 = pneg %p715
      $region58: #{node_aggregator_forward.1} parent=5 // pred_check_branch
        %718 = sbr.rel (%p716) target = $region60
      $region59: #{node_aggregator_forward.1} parent=5 // pred_region
        %s719 = ssub.s32 %s21, 2
        // Predicated region
        $region61: #{node_aggregator_forward.1} parent=59 // pred_check
          %p720 = pneg %p212
        $region62: #{node_aggregator_forward.1} parent=59 // pred_check_branch
          %722 = sbr.rel (%p720) target = $region64
        $region63: #{node_aggregator_forward.1} parent=59 // pred_region
          %s723 = sand.u32 %s197, 1
          %s724 = scalar_lea.sflag [#allocation3], %s723
          %s725 = sand.u32 %s197, 1
          %s726 = smul.addr %s725, 8
          %s727 = scalar_lea.vmem [#allocation2], %s726
          %728 = dma.done %s724, 128
        $region64: #{node_aggregator_forward.1} parent=59 // pred_fallthru
          _
        // Predicated region
        $region65: #{node_aggregator_forward.1} parent=59 // pred_check
          %p729 = pneg %p238
        $region66: #{node_aggregator_forward.1} parent=59 // pred_check_branch
          %731 = sbr.rel (%p729) target = $region68
        $region67: #{node_aggregator_forward.1} parent=59 // pred_region
          %s732 = sand.u32 %s223, 1
          %s733 = scalar_lea.sflag [#allocation5], %s732
          %s734 = sand.u32 %s223, 1
          %s735 = smul.addr %s734, 8
          %s736 = scalar_lea.vmem [#allocation4], %s735
          %737 = dma.done %s733, 128
        $region68: #{node_aggregator_forward.1} parent=59 // pred_fallthru
          _
      $region60: #{node_aggregator_forward.1} parent=5 // pred_fallthru
        _
    $region6: #{node_aggregator_forward.1} parent=1 // loop_footer
      %s25 = sadd.s32 1, %s21
    $region7: #{node_aggregator_forward.1} parent=1 // loop_footer_branch
      %20 = sbr.rel target = $region3
    $region8: #{node_aggregator_forward.1} parent=1 // loop_exit
      _
    %738 = vsyncpa [#allocation3], 1
    %s739 = scalar_lea.sflag [#allocation3], 1
    %740 = vsyncpa %s739, 1
    %741 = vsyncpa [#allocation5], 1
    %s742 = scalar_lea.sflag [#allocation5], 1
    %743 = vsyncpa %s742, 1

</llo_original>
